<compile_context>
chip_gen: v7x
topology: tpu7x:2x2x1
jax: 0.10.0
libtpu: 0.0.40
codegen_flags: <defaults>
</compile_context>

<pallas_src>
import functools

import jax
import jax.numpy as jnp
from jax.experimental import pallas as pl
from jax.experimental.pallas import tpu as pltpu


def _round_up(x, m):
    return ((x + m - 1) // m) * m


def _pad_axis(x, axis, multiple):
    pad = (-x.shape[axis]) % multiple
    if pad == 0:
        return x
    cfg = [(0, 0)] * x.ndim
    cfg[axis] = (0, pad)
    return jnp.pad(x, cfg)


def _fertility_kernel(align_ref, v_ref, pos_ref, pe_ref, out_ref, acc_ref, *,
                      compute_dtype):
    # grid = (b, t, d, s); s = contraction over input positions (innermost, "arbitrary").
    s_idx = pl.program_id(3)

    @pl.when(s_idx == 0)
    def _init():
        # Positional term computed once per output tile, folded into the accumulator
        # init: (bB, F1, tT) x (F1, tD) -> (bB, tT, tD), contracting F1 (~5).
        pos = pos_ref[...].astype(compute_dtype)
        pe = pe_ref[...].astype(compute_dtype)
        acc_ref[...] = jnp.einsum("bft,fd->btd", pos, pe,
                                  preferred_element_type=jnp.float32)

    # Main term on the native (B,S,T)/(B,S,D) layouts: contract S, batch over B.
    # bf16 operands + f32 accumulation -> full-rate MXU; operand transpose stays
    # in VMEM (XLU), no HBM transpose.
    a = align_ref[...].astype(compute_dtype)
    v = v_ref[...].astype(compute_dtype)
    acc_ref[...] += jnp.einsum("bst,bsd->btd", a, v,
                               preferred_element_type=jnp.float32)

    @pl.when(s_idx == pl.num_programs(3) - 1)
    def _fin():
        out_ref[...] = acc_ref[...].astype(out_ref.dtype)


def fertility_forward(marginal_alignment, marginal_positions, log_likelihood,
                      inputs_v, pos_embedding, *, compute_dtype=jnp.bfloat16):
    """
    marginal_alignment: (B, S_in, T_out)   -- native layout from compute_marginal_alignment
    marginal_positions: (B, F1, T_out)
    log_likelihood:     (B,)
    inputs_v:           (B, S_in, D)
    pos_embedding:      (1, F1, D)         -- positional_mode='sum', positional_dim == D
    compute_dtype:      matmul operand dtype (bf16 default; use jnp.float32 for parity).
    Returns a dict mirroring FertilityModel.forward (target_mask provided path).
    """
    B, S, T = marginal_alignment.shape
    F1 = marginal_positions.shape[1]
    D = inputs_v.shape[-1]
    pe = pos_embedding.reshape(F1, -1)
    assert pe.shape[-1] == D, "positional_mode='sum' requires positional_dim == input dim"

    out_dtype = inputs_v.dtype
    itemsize = jnp.dtype(inputs_v.dtype).itemsize
    qS = max(8, 32 // itemsize)            # sublane quantum of the contraction dim
    F1p = _round_up(F1, qS)                # sublane padding of the F1(~5) dim

    # ---- generation-aware VMEM budget (64 MiB/TC on v7x, 128 MiB on v5e/v6e) ----
    try:
        vmem_cap = int(pltpu.get_tpu_info().vmem_capacity_bytes)
    except Exception:
        vmem_cap = 64 << 20
    budget = (vmem_cap * 3) // 4           # headroom for Mosaic internal scratch

    # ---- batch fold for tiny shapes; keep >=2 parallel steps (v7x has 2 TCs) ----
    tiny = 2 * T * S * D < (1 << 22)
    bB = (B // 2) if (tiny and B > 2) else 1
    while B % bB:
        bB -= 1

    # ---- tiling: big tiles, shrink only if over the queried VMEM budget --------
    tS_t, tT_t = 2048, 512
    tD_t = max(128, min(_round_up(D, 128), 2048))   # prefer full D -> nD=1 (align read once)

    def _tiles():
        return (min(_round_up(S, qS), tS_t),
                min(_round_up(T, 128), tT_t),
                min(_round_up(D, 128), tD_t))

    def _need_bytes(tS, tT, tD, bufs):
        return (bufs * bB * tS * (tT + tD) * itemsize        # align + inputs_v (streamed)
                + 2 * (bB * F1p * tT + F1p * tD) * itemsize  # positions + embedding
                + 2 * bB * tT * tD * itemsize                # output
                + bB * tT * tD * 4)                          # f32 accumulator

    while True:
        tS, tT, tD = _tiles()
        if _need_bytes(tS, tT, tD, 3) <= budget:
            break
        if tS_t > 512:
            tS_t //= 2
        elif tD_t > 512:
            tD_t //= 2
        elif tT_t > 128:
            tT_t //= 2
        elif tS_t > 128:
            tS_t //= 2
        elif tD_t > 128:
            tD_t //= 2
        else:
            break

    # ---- zero-pad to tile multiples (no-op when shapes already divide) ----------
    align_p = _pad_axis(_pad_axis(marginal_alignment, 1, tS), 2, tT)
    v_p = _pad_axis(_pad_axis(inputs_v, 1, tS), 2, tD)
    pos_p = _pad_axis(marginal_positions, 2, tT)
    pe_p = _pad_axis(pe, 1, tD)
    S_p, T_p, D_p = align_p.shape[1], align_p.shape[2], v_p.shape[2]

    nB, nT, nD, nS = B // bB, T_p // tT, D_p // tD, S_p // tS
    total_steps = nB * nT * nD * nS
    deep = 3 if total_steps >= 4 else None

    need = _need_bytes(tS, tT, tD, 3 if deep else 2)
    vmem_limit = int(min(budget, max(need + need // 4, 16 << 20)))

    cost = pl.CostEstimate(
        flops=2 * B * T_p * (S_p + F1) * D_p,
        transcendentals=0,
        bytes_accessed=int((align_p.size + pos_p.size + v_p.size + pe_p.size
                            + B * T_p * D_p) * itemsize))

    def _spec(shape, index_map, buffers=None):
        if buffers is not None:
            try:
                return pl.BlockSpec(shape, index_map, pipeline_mode=pl.Buffered(buffers))
            except Exception:
                pass
        return pl.BlockSpec(shape, index_map)

    def _build(buffers):
        return pl.pallas_call(
            functools.partial(_fertility_kernel, compute_dtype=compute_dtype),
            out_shape=jax.ShapeDtypeStruct((B, T_p, D_p), out_dtype),
            grid_spec=pltpu.PrefetchScalarGridSpec(
                num_scalar_prefetch=0,
                grid=(nB, nT, nD, nS),
                in_specs=[
                    # marginal_alignment (B, S, T) -- native layout, no HBM transpose
                    _spec((bB, tS, tT), lambda b, t, d, s: (b, s, t), buffers),
                    # inputs_v (B, S, D)
                    _spec((bB, tS, tD), lambda b, t, d, s: (b, s, d), buffers),
                    # marginal_positions (B, F1, T) -- block index s/d-invariant
                    pl.BlockSpec((bB, F1, tT), lambda b, t, d, s: (b, 0, t)),
                    # positional embedding (F1, D) -- shared across batch
                    pl.BlockSpec((F1, tD), lambda b, t, d, s: (0, d)),
                ],
                out_specs=pl.BlockSpec((bB, tT, tD), lambda b, t, d, s: (b, t, d)),
                scratch_shapes=[pltpu.VMEM((bB, tT, tD), jnp.float32)],
            ),
            compiler_params=pltpu.CompilerParams(
                dimension_semantics=("parallel", "parallel", "parallel", "arbitrary"),
                vmem_limit_bytes=vmem_limit),
            cost_estimate=cost,
        )

    try:
        out = _build(deep)(align_p, v_p, pos_p, pe_p)
    except Exception:
        if deep is None:
            raise
        out = _build(None)(align_p, v_p, pos_p, pe_p)   # fallback: default 2-deep pipeline

    if T_p != T or D_p != D:
        out = out[:, :T, :D]

    # Mirror FertilityModel.forward's return dict; the transposed marginals are
    # return values only -- the kernel path never materializes them in HBM.
    return {
        "marginal_alignment": jnp.swapaxes(marginal_alignment, 1, 2),
        "marginal_positions": jnp.swapaxes(marginal_positions, 1, 2),
        "output": out,
        "log_likelihood": log_likelihood,
    }


def _reference(marginal_alignment, marginal_positions, inputs_v, pos_embedding,
               compute_dtype):
    # Same numerics as the kernel: compute_dtype operands, f32 accumulation.
    a = marginal_alignment.astype(compute_dtype)
    v = inputs_v.astype(compute_dtype)
    p = marginal_positions.astype(compute_dtype)
    e = pos_embedding[0].astype(compute_dtype)
    out = (jnp.einsum("bst,bsd->btd", a, v, preferred_element_type=jnp.float32)
           + jnp.einsum("bft,fd->btd", p, e, preferred_element_type=jnp.float32))
    return out.astype(inputs_v.dtype)


def _run_case(key, B, S_in, T_out, D, F1, compute_dtype, atol, rtol):
    k1, k2, k3, k4, k5 = jax.random.split(key, 5)
    inputs_v = jax.random.normal(k1, (B, S_in, D), dtype=jnp.float32)
    pos_embedding = jax.random.normal(k2, (1, F1, D), dtype=jnp.float32)
    marginal_alignment = jax.nn.softmax(
        jax.random.normal(k3, (B, S_in, T_out), dtype=jnp.float32), axis=1)
    marginal_positions = jax.nn.softmax(
        jax.random.normal(k4, (B, F1, T_out), dtype=jnp.float32), axis=1)
    log_likelihood = jax.random.normal(k5, (B,), dtype=jnp.float32)

    ret = fertility_forward(marginal_alignment, marginal_positions,
                            log_likelihood, inputs_v, pos_embedding,
                            compute_dtype=compute_dtype)
    out = jax.block_until_ready(ret["output"])
    ref = _reference(marginal_alignment, marginal_positions, inputs_v,
                     pos_embedding, compute_dtype)
    assert out.shape == (B, T_out, D)
    err = float(jnp.max(jnp.abs(out - ref)))
    assert jnp.allclose(out, ref, atol=atol, rtol=rtol), f"mismatch: max abs err {err}"


if __name__ == "__main__":
    maximum_fertility = 4
    F1 = maximum_fertility + 1

    key = jax.random.PRNGKey(0)
    k1, k2, k3, k4 = jax.random.split(key, 4)

    # 1) Small shapes, f32 compute path (parity-style check).
    _run_case(k1, B=2, S_in=8, T_out=8, D=32, F1=F1,
              compute_dtype=jnp.float32, atol=1e-4, rtol=1e-4)

    # 2) Tiny shapes with B=4: exercises the batch-fold (bB=2) batched contraction.
    _run_case(k2, B=4, S_in=8, T_out=8, D=32, F1=F1,
              compute_dtype=jnp.bfloat16, atol=2e-3, rtol=2e-2)

    # 3) Non-divisible dims: exercises the zero-padding remainder path.
    _run_case(k3, B=2, S_in=1000, T_out=130, D=160, F1=F1,
              compute_dtype=jnp.bfloat16, atol=2e-3, rtol=2e-2)

    # 4) Larger shape: tiled accumulation over S (nS=2), Buffered(3) pipeline.
    _run_case(k4, B=2, S_in=4096, T_out=512, D=256, F1=F1,
              compute_dtype=jnp.bfloat16, atol=2e-3, rtol=2e-2)

    print("KERNEL_OK")
</pallas_src>

<mosaic_0001>
module attributes {stable_mosaic.version = 11 : i64} {
  func.func @_fertility_kernel(%arg0: i32, %arg1: i32, %arg2: i32, %arg3: i32, %arg4: memref<1x8x128xf32, #tpu.memory_space<vmem>>, %arg5: memref<1x8x128xf32, #tpu.memory_space<vmem>>, %arg6: memref<1x5x128xf32, #tpu.memory_space<vmem>>, %arg7: memref<5x128xf32, #tpu.memory_space<vmem>>, %arg8: memref<1x128x128xf32, #tpu.memory_space<vmem>>, %arg9: memref<1x128x128xf32, #tpu.memory_space<vmem>>) attributes {dimension_semantics = [#tpu.dimension_semantics<parallel>, #tpu.dimension_semantics<parallel>, #tpu.dimension_semantics<parallel>, #tpu.dimension_semantics<arbitrary>], iteration_bounds = array<i64: 2, 1, 1, 1>, scalar_prefetch = 0 : i64, scratch_operands = 1 : i64, tpu.core_type = #tpu.core_type<tc>, window_params = [{transform_indices = @transform_0, window_bounds = array<i64: 1, 8, 128>}, {transform_indices = @transform_1, window_bounds = array<i64: 1, 8, 128>}, {transform_indices = @transform_2, window_bounds = array<i64: 1, 5, 128>}, {transform_indices = @transform_3, window_bounds = array<i64: 5, 128>}, {transform_indices = @transform_4, window_bounds = array<i64: 1, 128, 128>}]} {
    %c0_i32 = arith.constant 0 : i32
    %0 = arith.cmpi eq, %arg3, %c0_i32 : i32
    %1 = arith.extui %0 : i1 to i32
    %c0_i32_0 = arith.constant 0 : i32
    %2 = arith.cmpi ne, %1, %c0_i32_0 : i32
    scf.if %2 {
      %c0_14 = arith.constant 0 : index
      %c0_15 = arith.constant 0 : index
      %c0_16 = arith.constant 0 : index
      %12 = vector.load %arg6[%c0_14, %c0_15, %c0_16] : memref<1x5x128xf32, #tpu.memory_space<vmem>>, vector<1x5x128xf32>
      %c0_17 = arith.constant 0 : index
      %c0_18 = arith.constant 0 : index
      %13 = vector.load %arg7[%c0_17, %c0_18] : memref<5x128xf32, #tpu.memory_space<vmem>>, vector<5x128xf32>
      "tpu.trace_start"() <{level = 10 : i32, message = "bft,fd->btd"}> : () -> ()
      %cst_19 = arith.constant dense<0.000000e+00> : vector<1x128x128xf32>
      %14 = tpu.matmul %12, %13, %cst_19 {dimension_numbers = #tpu.dot_dimension_numbers<[1], [0], [0, 2], [1], [0, 0, 0, 2, 1, 1], [], []>} : vector<1x5x128xf32>, vector<5x128xf32>, vector<1x128x128xf32> -> vector<1x128x128xf32>
      "tpu.trace_stop"() : () -> ()
      %c0_20 = arith.constant 0 : index
      %c0_21 = arith.constant 0 : index
      %c0_22 = arith.constant 0 : index
      %15 = vector.load %arg9[%c0_20, %c0_21, %c0_22] : memref<1x128x128xf32, #tpu.memory_space<vmem>>, vector<1x128x128xf32>
      tpu.vector_store %arg9[%c0_20, %c0_21, %c0_22], %14 {strides = array<i32>} : memref<1x128x128xf32, #tpu.memory_space<vmem>>, vector<1x128x128xf32>,
    } else {
    }
    %c0 = arith.constant 0 : index
    %c0_1 = arith.constant 0 : index
    %c0_2 = arith.constant 0 : index
    %3 = vector.load %arg4[%c0, %c0_1, %c0_2] : memref<1x8x128xf32, #tpu.memory_space<vmem>>, vector<1x8x128xf32>
    %c0_3 = arith.constant 0 : index
    %c0_4 = arith.constant 0 : index
    %c0_5 = arith.constant 0 : index
    %4 = vector.load %arg5[%c0_3, %c0_4, %c0_5] : memref<1x8x128xf32, #tpu.memory_space<vmem>>, vector<1x8x128xf32>
    %c0_6 = arith.constant 0 : index
    %c0_7 = arith.constant 0 : index
    %c0_8 = arith.constant 0 : index
    %5 = vector.load %arg9[%c0_6, %c0_7, %c0_8] : memref<1x128x128xf32, #tpu.memory_space<vmem>>, vector<1x128x128xf32>
    "tpu.trace_start"() <{level = 10 : i32, message = "bst,bsd->btd"}> : () -> ()
    %cst = arith.constant dense<0.000000e+00> : vector<1x128x128xf32>
    %6 = tpu.matmul %3, %4, %cst {dimension_numbers = #tpu.dot_dimension_numbers<[1], [1], [2], [2], [0, 0, 0, 2, 1, 2], [0], [0]>} : vector<1x8x128xf32>, vector<1x8x128xf32>, vector<1x128x128xf32> -> vector<1x128x128xf32>
    "tpu.trace_stop"() : () -> ()
    %7 = arith.addf %5, %6 : vector<1x128x128xf32>
    %c0_9 = arith.constant 0 : index
    %c0_10 = arith.constant 0 : index
    %c0_11 = arith.constant 0 : index
    %8 = vector.load %arg9[%c0_9, %c0_10, %c0_11] : memref<1x128x128xf32, #tpu.memory_space<vmem>>, vector<1x128x128xf32>
    tpu.vector_store %arg9[%c0_9, %c0_10, %c0_11], %7 {strides = array<i32>} : memref<1x128x128xf32, #tpu.memory_space<vmem>>, vector<1x128x128xf32>,
    %c0_i32_12 = arith.constant 0 : i32
    %9 = arith.cmpi eq, %arg3, %c0_i32_12 : i32
    %10 = arith.extui %9 : i1 to i32
    %c0_i32_13 = arith.constant 0 : i32
    %11 = arith.cmpi ne, %10, %c0_i32_13 : i32
    scf.if %11 {
      %c0_14 = arith.constant 0 : index
      %c0_15 = arith.constant 0 : index
      %c0_16 = arith.constant 0 : index
      %12 = vector.load %arg9[%c0_14, %c0_15, %c0_16] : memref<1x128x128xf32, #tpu.memory_space<vmem>>, vector<1x128x128xf32>
      %c0_17 = arith.constant 0 : index
      %c0_18 = arith.constant 0 : index
      %c0_19 = arith.constant 0 : index
      %13 = vector.load %arg8[%c0_17, %c0_18, %c0_19] : memref<1x128x128xf32, #tpu.memory_space<vmem>>, vector<1x128x128xf32>
      tpu.vector_store %arg8[%c0_17, %c0_18, %c0_19], %12 {strides = array<i32>} : memref<1x128x128xf32, #tpu.memory_space<vmem>>, vector<1x128x128xf32>,
    } else {
    }
    return
  }
  func.func @transform_0(%arg0: i32, %arg1: i32, %arg2: i32, %arg3: i32) -> (i32, i32, i32) {
    %c0_i32 = arith.constant 0 : i32
    return %arg0, %arg3, %arg1 : i32, i32, i32
  }
  func.func @transform_1(%arg0: i32, %arg1: i32, %arg2: i32, %arg3: i32) -> (i32, i32, i32) {
    %c0_i32 = arith.constant 0 : i32
    return %arg0, %arg3, %arg2 : i32, i32, i32
  }
  func.func @transform_2(%arg0: i32, %arg1: i32, %arg2: i32, %arg3: i32) -> (i32, i32, i32) {
    %c0_i32 = arith.constant 0 : i32
    %c0_i32_0 = arith.constant 0 : i32
    return %arg0, %c0_i32, %arg1 : i32, i32, i32
  }
  func.func @transform_3(%arg0: i32, %arg1: i32, %arg2: i32, %arg3: i32) -> (i32, i32) {
    %c0_i32 = arith.constant 0 : i32
    %c0_i32_0 = arith.constant 0 : i32
    return %c0_i32, %arg2 : i32, i32
  }
  func.func @transform_4(%arg0: i32, %arg1: i32, %arg2: i32, %arg3: i32) -> (i32, i32, i32) {
    %c0_i32 = arith.constant 0 : i32
    return %arg0, %arg1, %arg2 : i32, i32, i32
  }
}

</mosaic_0001>

<llo_original>
// kernel: tpu_custom_call.1
$region0: #{tpu_custom_call.1}
  #allocation0 [shape = 'u32[]', space=smem, size = 0x4, offset = 0x4, fixed_abs, tag = 'smem constant byte address 0x4 - core index']
  #allocation1 [shape = 'u32[144,128]{1,0:T(1,128)}', space=vmem, size = 0x12000, scoped, tag = 'internal scratch']
  #allocation2 [shape = 'f32[1,128,128]{2,1,0:T(8,128)}', space=vmem, size = 0x10000, scoped, tag = 'scratch operand']
  %s0 = inlined_call_operand.vmem [shape: f32[2,8,128], index: 0, kind: input, shape index: {}]
  %s1 = inlined_call_operand.hbm [shape: f32[2,8,128], index: 1, kind: input, shape index: {}]
  %s2 = inlined_call_operand.vmem [shape: f32[2,5,128], index: 2, kind: input, shape index: {}]
  %s3 = inlined_call_operand.vmem [shape: f32[5,128], index: 3, kind: input, shape index: {}]
  %s4 = inlined_call_operand.hbm [shape: f32[2,128,128], index: 4, kind: output, shape index: {}]
  %s5 = sld [smem:[#allocation0]]
  $region61: #{tpu_custom_call.1} parent=0
    _
  %s7 = ssub.s32 1, %s5
  %s8 = scalar_select 0, %s7, %s5
  $region1: #{tpu_custom_call.1} parent=0
    #allocation3 [shape = 'u8[8192]{0}', space=vmem, size = 0x2000, scoped, tag = 'input window, operand 1']
    #allocation4 [shape = 's32[2]{0}', space=sflag, size = 0x8, scoped, tag = 'scoped memory for tpu_custom_call.1']
    #allocation5 [shape = 's32[2]{0}', space=sflag, size = 0x8, scoped, tag = 'scoped memory for tpu_custom_call.1']
    #allocation6 [shape = 'u8[131072]{0}', space=vmem, size = 0x20000, scoped, tag = 'output window, operand 0']
    %9 = vsyncpa [#allocation4], 0
    %s10 = scalar_lea.sflag [#allocation4], 1
    %11 = vsyncpa %s10, 0
    %12 = vsyncpa [#allocation5], 0
    %s13 = scalar_lea.sflag [#allocation5], 1
    %14 = vsyncpa %s13, 0
    loop: start=0, step=1, limit=4
    $region2: #{tpu_custom_call.1} parent=1 // loop_pre_header
      _
    $region3: #{tpu_custom_call.1} parent=1 // loop_header
      %s16 = sphi 0, %s20
      %p17 = scmp.ge.s32.totalorder %s16, 4
      %s23 = sphi 0, %s49
      %s24 = sphi 0, %s45
      %s25 = sphi 0, %s41
      %s26 = sphi 0, %s37
      %s27 = sphi 0, %s23
      %s28 = sphi 0, %s24
      %s29 = sphi 0, %s25
      %s30 = sphi 0, %s26
      %s31 = sphi 0, %s27
      %s32 = sphi 0, %s28
      %s33 = sphi 0, %s29
      %s34 = sphi 0, %s30
      %s56 = sphi 0, %s58
      %s59 = sphi 0, %s56
      %s60 = sphi 0, %s59
      %s76 = sphi 0, %s60
      %s86 = sphi 0, %s88
      %s89 = sphi 0, %s86
      %s90 = sphi 0, %s89
      %s106 = sphi 0, %s90
      %s114 = sphi 0, %s116
      %s117 = sphi 0, %s114
      %s118 = sphi 0, %s117
      %s134 = sphi 0, %s118
      %s140 = sphi 0, %s142
      %s143 = sphi 0, %s140
      %s144 = sphi 0, %s143
      %s160 = sphi 0, %s144
      %s170 = sphi 0, %s172
      %s173 = sphi 0, %s170
      %s174 = sphi 0, %s173
      %s190 = sphi 0, %s174
    $region4: #{tpu_custom_call.1} parent=1 // loop_header_branch
      %19 = sbr.rel (%p17) target = $region8
    $region5: #{tpu_custom_call.1} parent=1 // loop_body
      %s21 = ssub.s32 %s16, 1
      %s22 = ssub.s32 %s16, 2
      %s35 = sadd.s32 1, %s26
      %p36 = scmp.ge.s32.totalorder %s35, 1
      %s37 = scalar_select %p36, 0, %s35
      %s38 = sadd.s32 1, %s25
      %s39 = scalar_select %p36, %s38, %s25
      %p40 = scmp.ge.s32.totalorder %s39, 1
      %s41 = scalar_select %p40, 0, %s39
      %s42 = sadd.s32 1, %s24
      %s43 = scalar_select %p40, %s42, %s24
      %p44 = scmp.ge.s32.totalorder %s43, 1
      %s45 = scalar_select %p44, 0, %s43
      %s46 = sadd.s32 1, %s23
      %s47 = scalar_select %p44, %s46, %s23
      %p48 = scmp.ge.s32.totalorder %s47, 2
      %s49 = scalar_select %p48, 0, %s47
      %s50 = ssub.s32 %s23, %s49
      %s51 = ssub.s32 %s26, %s37
      %s52 = sor.u32 %s50, %s51
      %s53 = ssub.s32 %s24, %s45
      %s54 = sor.u32 %s52, %s53
      %p55 = scmp.eq.s32.totalorder %s54, 0
      %s57 = sadd.s32 %s56, 1
      %s58 = scalar_select %p55, %s56, %s57
      %p61 = pneg %p55
      %p62 = scmp.eq.s32.totalorder %s16, 1
      %p63 = por %p61, %p62
      %p64 = scmp.ne.s32.totalorder %s56, %s59
      %p65 = scmp.eq.s32.totalorder %s16, 0
      %p66 = por %p64, %p65
      %p67 = scmp.ne.s32.totalorder %s56, %s59
      %p68 = scmp.eq.s32.totalorder %s21, 1
      %p69 = por %p67, %p68
      %p70 = scmp.ne.s32.totalorder %s59, %s60
      %p71 = scmp.eq.s32.totalorder %s21, 0
      %p72 = por %p70, %p71
      %p73 = scmp.ne.s32.totalorder %s59, %s60
      %p74 = scmp.eq.s32.totalorder %s22, 1
      %p75 = por %p73, %p74
      %p77 = scmp.ne.s32.totalorder %s60, %s76
      %p78 = scmp.eq.s32.totalorder %s22, 0
      %p79 = por %p77, %p78
      %s80 = ssub.s32 %s23, %s49
      %s81 = ssub.s32 %s26, %s37
      %s82 = sor.u32 %s80, %s81
      %s83 = ssub.s32 %s25, %s41
      %s84 = sor.u32 %s82, %s83
      %p85 = scmp.eq.s32.totalorder %s84, 0
      %s87 = sadd.s32 %s86, 1
      %s88 = scalar_select %p85, %s86, %s87
      %p91 = pneg %p85
      %p92 = scmp.eq.s32.totalorder %s16, 1
      %p93 = por %p91, %p92
      %p94 = scmp.ne.s32.totalorder %s86, %s89
      %p95 = scmp.eq.s32.totalorder %s16, 0
      %p96 = por %p94, %p95
      %p97 = scmp.ne.s32.totalorder %s86, %s89
      %p98 = scmp.eq.s32.totalorder %s21, 1
      %p99 = por %p97, %p98
      %p100 = scmp.ne.s32.totalorder %s89, %s90
      %p101 = scmp.eq.s32.totalorder %s21, 0
      %p102 = por %p100, %p101
      %p103 = scmp.ne.s32.totalorder %s89, %s90
      %p104 = scmp.eq.s32.totalorder %s22, 1
      %p105 = por %p103, %p104
      %p107 = scmp.ne.s32.totalorder %s90, %s106
      %p108 = scmp.eq.s32.totalorder %s22, 0
      %p109 = por %p107, %p108
      %s110 = ssub.s32 %s23, %s49
      %s111 = ssub.s32 %s24, %s45
      %s112 = sor.u32 %s110, %s111
      %p113 = scmp.eq.s32.totalorder %s112, 0
      %s115 = sadd.s32 %s114, 1
      %s116 = scalar_select %p113, %s114, %s115
      %p119 = pneg %p113
      %p120 = scmp.eq.s32.totalorder %s16, 1
      %p121 = por %p119, %p120
      %p122 = scmp.ne.s32.totalorder %s114, %s117
      %p123 = scmp.eq.s32.totalorder %s16, 0
      %p124 = por %p122, %p123
      %p125 = scmp.ne.s32.totalorder %s114, %s117
      %p126 = scmp.eq.s32.totalorder %s21, 1
      %p127 = por %p125, %p126
      %p128 = scmp.ne.s32.totalorder %s117, %s118
      %p129 = scmp.eq.s32.totalorder %s21, 0
      %p130 = por %p128, %p129
      %p131 = scmp.ne.s32.totalorder %s117, %s118
      %p132 = scmp.eq.s32.totalorder %s22, 1
      %p133 = por %p131, %p132
      %p135 = scmp.ne.s32.totalorder %s118, %s134
      %p136 = scmp.eq.s32.totalorder %s22, 0
      %p137 = por %p135, %p136
      %s138 = ssub.s32 %s25, %s41
      %p139 = scmp.eq.s32.totalorder %s138, 0
      %s141 = sadd.s32 %s140, 1
      %s142 = scalar_select %p139, %s140, %s141
      %p145 = pneg %p139
      %p146 = scmp.eq.s32.totalorder %s16, 1
      %p147 = por %p145, %p146
      %p148 = scmp.ne.s32.totalorder %s140, %s143
      %p149 = scmp.eq.s32.totalorder %s16, 0
      %p150 = por %p148, %p149
      %p151 = scmp.ne.s32.totalorder %s140, %s143
      %p152 = scmp.eq.s32.totalorder %s21, 1
      %p153 = por %p151, %p152
      %p154 = scmp.ne.s32.totalorder %s143, %s144
      %p155 = scmp.eq.s32.totalorder %s21, 0
      %p156 = por %p154, %p155
      %p157 = scmp.ne.s32.totalorder %s143, %s144
      %p158 = scmp.eq.s32.totalorder %s22, 1
      %p159 = por %p157, %p158
      %p161 = scmp.ne.s32.totalorder %s144, %s160
      %p162 = scmp.eq.s32.totalorder %s22, 0
      %p163 = por %p161, %p162
      %s164 = ssub.s32 %s23, %s49
      %s165 = ssub.s32 %s24, %s45
      %s166 = sor.u32 %s164, %s165
      %s167 = ssub.s32 %s25, %s41
      %s168 = sor.u32 %s166, %s167
      %p169 = scmp.eq.s32.totalorder %s168, 0
      %s171 = sadd.s32 %s170, 1
      %s172 = scalar_select %p169, %s170, %s171
      %p175 = pneg %p169
      %p176 = scmp.eq.s32.totalorder %s16, 1
      %p177 = por %p175, %p176
      %p178 = scmp.ne.s32.totalorder %s170, %s173
      %p179 = scmp.eq.s32.totalorder %s16, 0
      %p180 = por %p178, %p179
      %p181 = scmp.ne.s32.totalorder %s170, %s173
      %p182 = scmp.eq.s32.totalorder %s21, 1
      %p183 = por %p181, %p182
      %p184 = scmp.ne.s32.totalorder %s173, %s174
      %p185 = scmp.eq.s32.totalorder %s21, 0
      %p186 = por %p184, %p185
      %p187 = scmp.ne.s32.totalorder %s173, %s174
      %p188 = scmp.eq.s32.totalorder %s22, 1
      %p189 = por %p187, %p188
      %p191 = scmp.ne.s32.totalorder %s174, %s190
      %p192 = scmp.eq.s32.totalorder %s22, 0
      %p193 = por %p191, %p192
      %p194 = scmp.le.s32.totalorder 1, %s16
      %p195 = scmp.lt.s32.totalorder %s16, 3
      %p196 = pnand %p194, %p195
      %p197 = pneg %p196
      // Predicated region
      $region9: #{tpu_custom_call.1} parent=5 // pred_check
        _
      $region10: #{tpu_custom_call.1} parent=5 // pred_check_branch
        %199 = sbr.rel (%p196) target = $region12
      $region11: #{tpu_custom_call.1} parent=5 // pred_region
        %s200 = ssub.s32 %s16, 1
        // Predicated region
        $region13: #{tpu_custom_call.1} parent=11 // pred_check
          %p201 = pneg %p156
        $region14: #{tpu_custom_call.1} parent=11 // pred_check_branch
          %203 = sbr.rel (%p201) target = $region16
        $region15: #{tpu_custom_call.1} parent=11 // pred_region
          %p204 = scmp.lt.s32.totalorder %s29, 0
          %s205 = scalar_select %p204, %s29, 0
          %s206 = smul.addr %s205, 8
          %s207 = scalar_lea.vmem %s3, %s206
        $region16: #{tpu_custom_call.1} parent=11 // pred_fallthru
          _
      $region12: #{tpu_custom_call.1} parent=5 // pred_fallthru
        _
      %p208 = scmp.lt.s32.totalorder %s16, 2
      // Predicated region
      $region17: #{tpu_custom_call.1} parent=5 // pred_check
        %p209 = pneg %p208
      $region18: #{tpu_custom_call.1} parent=5 // pred_check_branch
        %211 = sbr.rel (%p209) target = $region20
      $region19: #{tpu_custom_call.1} parent=5 // pred_region
        // Predicated region
        $region21: #{tpu_custom_call.1} parent=19 // pred_check
          %p212 = pneg %p66
        $region22: #{tpu_custom_call.1} parent=19 // pred_check_branch
          %214 = sbr.rel (%p212) target = $region24
        $region23: #{tpu_custom_call.1} parent=19 // pred_region
          %p215 = scmp.lt.s32.totalorder %s23, 1
          %s216 = scalar_select %p215, %s23, 1
          %p217 = scmp.lt.s32.totalorder %s26, 0
          %s218 = scalar_select %p217, %s26, 0
          %p219 = scmp.lt.s32.totalorder %s24, 0
          %s220 = scalar_select %p219, %s24, 0
          %s221 = sadd.s32 %s220, %s218
          %s222 = sadd.s32 %s221, %s216
          %s223 = smul.addr %s222, 8
          %s224 = scalar_lea.vmem %s0, %s223
        $region24: #{tpu_custom_call.1} parent=19 // pred_fallthru
          _
        // Predicated region
        $region25: #{tpu_custom_call.1} parent=19 // pred_check
          %p225 = pneg %p96
        $region26: #{tpu_custom_call.1} parent=19 // pred_check_branch
          %227 = sbr.rel (%p225) target = $region28
        $region27: #{tpu_custom_call.1} parent=19 // pred_region
          %s228 = sand.u32 %s86, 1
          %s229 = scalar_lea.sflag [#allocation4], %s228
          %s230 = sand.u32 %s86, 1
          %s231 = smul.addr %s230, 8
          %s232 = scalar_lea.vmem [#allocation3], %s231
          %s234 = ssub.s32 128, 128
          %235 = vsyncadd %s229, %s234
          %s236 = sadd.s32 %s25, %s26
          %s237 = sadd.s32 %s236, %s23
          %s238 = smul.addr %s237, 128
          %s239 = scalar_lea.hbm %s1, %s238
          %s241 = sshll.u32 %s232, 4
          %s242 = int_to_ptr.vmem [resolvable:$true] %s241
          %244 = dma.hbm_to_vmem [thread:$0]  %s239, 128, %s242, %s229
        $region28: #{tpu_custom_call.1} parent=19 // pred_fallthru
          _
        // Predicated region
        $region29: #{tpu_custom_call.1} parent=19 // pred_check
          %p245 = pneg %p124
        $region30: #{tpu_custom_call.1} parent=19 // pred_check_branch
          %247 = sbr.rel (%p245) target = $region32
        $region31: #{tpu_custom_call.1} parent=19 // pred_region
          %p248 = scmp.lt.s32.totalorder %s23, 1
          %s249 = scalar_select %p248, %s23, 1
          %p250 = scmp.lt.s32.totalorder %s24, 0
          %s251 = scalar_select %p250, %s24, 0
          %s252 = sadd.s32 %s251, %s249
          %s253 = smul.addr %s252, 8
          %s254 = scalar_lea.vmem %s2, %s253
        $region32: #{tpu_custom_call.1} parent=19 // pred_fallthru
          _
      $region20: #{tpu_custom_call.1} parent=5 // pred_fallthru
        _
      %p255 = scmp.le.s32.totalorder 1, %s16
      %p256 = scmp.lt.s32.totalorder %s16, 3
      %p257 = pnand %p255, %p256
      %p258 = pneg %p257
      // Predicated region
      $region33: #{tpu_custom_call.1} parent=5 // pred_check
        _
      $region34: #{tpu_custom_call.1} parent=5 // pred_check_branch
        %260 = sbr.rel (%p257) target = $region36
      $region35: #{tpu_custom_call.1} parent=5 // pred_region
        %s261 = ssub.s32 %s16, 1
        %s262 = sand.u32 %s89, 1
        %s263 = scalar_lea.sflag [#allocation4], %s262
        %s264 = sand.u32 %s89, 1
        %s265 = smul.addr %s264, 8
        %s266 = scalar_lea.vmem [#allocation3], %s265
        // Predicated region
        $region37: #{tpu_custom_call.1} parent=35 // pred_check
          %p267 = pneg %p102
        $region38: #{tpu_custom_call.1} parent=35 // pred_check_branch
          %269 = sbr.rel (%p267) target = $region40
        $region39: #{tpu_custom_call.1} parent=35 // pred_region
          %270 = dma.done %s263, 128
        $region40: #{tpu_custom_call.1} parent=35 // pred_fallthru
          _
        %p271 = scmp.lt.s32.totalorder %s27, 1
        %s272 = scalar_select %p271, %s27, 1
        %p273 = scmp.lt.s32.totalorder %s30, 0
        %s274 = scalar_select %p273, %s30, 0
        %p275 = scmp.lt.s32.totalorder %s28, 0
        %s276 = scalar_select %p275, %s28, 0
        %s277 = sadd.s32 %s276, %s274
        %s278 = sadd.s32 %s277, %s272
        %s279 = smul.addr %s278, 8
        %s280 = scalar_lea.vmem %s0, %s279
        %p281 = pneg %p72
        %p282 = pneg %p69
        %s283 = sand.u32 %s89, 1
        %s284 = scalar_lea.sflag [#allocation4], %s283
        %s285 = sand.u32 %s89, 1
        %s286 = smul.addr %s285, 8
        %s287 = scalar_lea.vmem [#allocation3], %s286
        %p288 = pneg %p102
        %p289 = pneg %p99
        %p290 = scmp.lt.s32.totalorder %s27, 1
        %s291 = scalar_select %p290, %s27, 1
        %p292 = scmp.lt.s32.totalorder %s28, 0
        %s293 = scalar_select %p292, %s28, 0
        %s294 = sadd.s32 %s293, %s291
        %s295 = smul.addr %s294, 8
        %s296 = scalar_lea.vmem %s2, %s295
        %p297 = pneg %p130
        %p298 = pneg %p127
        %p299 = scmp.lt.s32.totalorder %s29, 0
        %s300 = scalar_select %p299, %s29, 0
        %s301 = smul.addr %s300, 8
        %s302 = scalar_lea.vmem %s3, %s301
        %p303 = pneg %p156
        %p304 = pneg %p153
        %p305 = pneg %p186
        %p306 = pneg %p183
        %s307 = sand.u32 %s173, 1
        %s308 = scalar_lea.sflag [#allocation5], %s307
        %s309 = sand.u32 %s173, 1
        %s310 = smul.addr %s309, 128
        %s311 = scalar_lea.vmem [#allocation6], %s310
        %p312 = scmp.lt.s32.totalorder %s27, 1
        %s313 = scalar_select %p312, %s27, 1
        %p314 = scmp.lt.s32.totalorder %s30, 0
        %s315 = scalar_select %p314, %s30, 0
        %p316 = scmp.lt.s32.totalorder %s28, 0
        %s317 = scalar_select %p316, %s28, 0
        %s318 = sadd.s32 %s317, %s315
        %s319 = sadd.s32 %s318, %s313
        %s320 = smul.addr %s319, 8
        %s321 = scalar_lea.vmem %s0, %s320
        %p322 = scmp.lt.s32.totalorder %s27, 1
        %s323 = scalar_select %p322, %s27, 1
        %p324 = scmp.lt.s32.totalorder %s28, 0
        %s325 = scalar_select %p324, %s28, 0
        %s326 = sadd.s32 %s325, %s323
        %s327 = smul.addr %s326, 8
        %s328 = scalar_lea.vmem %s2, %s327
        %p329 = scmp.lt.s32.totalorder %s29, 0
        %s330 = scalar_select %p329, %s29, 0
        %s331 = smul.addr %s330, 8
        %s332 = scalar_lea.vmem %s3, %s331
        %s333 = smul.u32 16, %s28
        %p334 = scmp.eq.s32.totalorder %s30, 0
        // Predicated region
        $region41: #{tpu_custom_call.1} parent=35 // pred_check
          %p335 = pneg %p334
        $region42: #{tpu_custom_call.1} parent=35 // pred_check_branch
          %337 = sbr.rel (%p335) target = $region44
        $region43: #{tpu_custom_call.1} parent=35 // pred_region
          %v338 = vld [vmem:[%s328] sm:$0x1f]
          %v339 = vld [vmem:[%s332] sm:$0x1f]
          %340 = vxpose.xlu0.b32.start [1/16] %v338, 128
          %341 = vxpose.xlu0.b32.cont [2/16] 0.0, 128
          %342 = vxpose.xlu0.b32.cont [3/16] 0.0, 128
          %343 = vxpose.xlu0.b32.cont [4/16] 0.0, 128
          %344 = vxpose.xlu0.b32.cont [5/16] 0.0, 128
          %345 = vxpose.xlu0.b32.cont [6/16] 0.0, 128
          %346 = vxpose.xlu0.b32.cont [7/16] 0.0, 128
          %347 = vxpose.xlu0.b32.cont [8/16] 0.0, 128
          %348 = vxpose.xlu0.b32.cont [9/16] 0.0, 128
          %349 = vxpose.xlu0.b32.cont [10/16] 0.0, 128
          %350 = vxpose.xlu0.b32.cont [11/16] 0.0, 128
          %351 = vxpose.xlu0.b32.cont [12/16] 0.0, 128
          %352 = vxpose.xlu0.b32.cont [13/16] 0.0, 128
          %353 = vxpose.xlu0.b32.cont [14/16] 0.0, 128
          %354 = vxpose.xlu0.b32.cont [15/16] 0.0, 128
          %355 = vxpose.xlu0.b32.end [16/16] 0.0, 128
          %v356 = vpop.trf.xlu0
          %v357 = vpop.trf.xlu0
          %v358 = vpop.trf.xlu0
          %v359 = vpop.trf.xlu0
          %v360 = vpop.trf.xlu0
          %v361 = vpop.trf.xlu0
          %v362 = vpop.trf.xlu0
          %v363 = vpop.trf.xlu0
          %v364 = vpop.trf.xlu0
          %v365 = vpop.trf.xlu0
          %v366 = vpop.trf.xlu0
          %v367 = vpop.trf.xlu0
          %v368 = vpop.trf.xlu0
          %v369 = vpop.trf.xlu0
          %v370 = vpop.trf.xlu0
          %v371 = vpop.trf.xlu0
          %vm372 = vcmask 39936
          %v374 = vsel %vm372, %v356, 0
          %v377 = vsel %vm372, %v357, 0
          %v380 = vsel %vm372, %v358, 0
          %v383 = vsel %vm372, %v359, 0
          %v386 = vsel %vm372, %v360, 0
          %v389 = vsel %vm372, %v361, 0
          %v392 = vsel %vm372, %v362, 0
          %v395 = vsel %vm372, %v363, 0
          %v398 = vsel %vm372, %v364, 0
          %v401 = vsel %vm372, %v365, 0
          %v404 = vsel %vm372, %v366, 0
          %v407 = vsel %vm372, %v367, 0
          %v410 = vsel %vm372, %v368, 0
          %v413 = vsel %vm372, %v369, 0
          %v416 = vsel %vm372, %v370, 0
          %v419 = vsel %vm372, %v371, 0
          %vm421 = vcmask 1044480
          %v423 = vsel %vm421, %v339, 0
          %425 = vmatprep.subr.mxu0 0.0
          %426 = vmatpush1.msra.mxu0 %v423
          %427 = vmatprep.subr.mxu0 0.0
          %428 = vmatpush1.msra.mxu0 0.0
          %429 = vmatprep.subr.mxu0 0.0
          %430 = vmatpush1.msra.mxu0 0.0
          %431 = vmatprep.subr.mxu0 0.0
          %432 = vmatpush1.msra.mxu0 0.0
          %433 = vmatprep.subr.mxu0 0.0
          %434 = vmatpush1.msra.mxu0 0.0
          %435 = vmatprep.subr.mxu0 0.0
          %436 = vmatpush1.msra.mxu0 0.0
          %437 = vmatprep.subr.mxu0 0.0
          %438 = vmatpush1.msra.mxu0 0.0
          %439 = vmatprep.subr.mxu0 0.0
          %440 = vmatpush1.msra.mxu0 0.0
          %441 = vmatprep.subr.mxu0 0.0
          %442 = vmatpush1.msra.mxu0 0.0
          %443 = vmatprep.subr.mxu0 0.0
          %444 = vmatpush1.msra.mxu0 0.0
          %445 = vmatprep.subr.mxu0 0.0
          %446 = vmatpush1.msra.mxu0 0.0
          %447 = vmatprep.subr.mxu0 0.0
          %448 = vmatpush1.msra.mxu0 0.0
          %449 = vmatprep.subr.mxu0 0.0
          %450 = vmatpush1.msra.mxu0 0.0
          %451 = vmatprep.subr.mxu0 0.0
          %452 = vmatpush1.msra.mxu0 0.0
          %453 = vmatprep.subr.mxu0 0.0
          %454 = vmatpush1.msra.mxu0 0.0
          %455 = vmatprep.subr.mxu0 0.0
          %456 = vmatpush1.msra.mxu0 0.0
          %457 = vmatprep.subr.mxu0 0.0
          %458 = vmatpush1.msra.mxu0 0.0
          %459 = vmatprep.subr.mxu0 0.0
          %460 = vmatpush1.msra.mxu0 0.0
          %461 = vmatprep.subr.mxu0 0.0
          %462 = vmatpush1.msra.mxu0 0.0
          %463 = vmatprep.subr.mxu0 0.0
          %464 = vmatpush1.msra.mxu0 0.0
          %465 = vmatprep.subr.mxu0 0.0
          %466 = vmatpush1.msra.mxu0 0.0
          %467 = vmatprep.subr.mxu0 0.0
          %468 = vmatpush1.msra.mxu0 0.0
          %469 = vmatprep.subr.mxu0 0.0
          %470 = vmatpush1.msra.mxu0 0.0
          %471 = vmatprep.subr.mxu0 0.0
          %472 = vmatpush1.msra.mxu0 0.0
          %473 = vmatprep.subr.mxu0 0.0
          %474 = vmatpush1.msra.mxu0 0.0
          %475 = vmatprep.subr.mxu0 0.0
          %476 = vmatpush1.msra.mxu0 0.0
          %477 = vmatprep.subr.mxu0 0.0
          %478 = vmatpush1.msra.mxu0 0.0
          %479 = vmatprep.subr.mxu0 0.0
          %480 = vmatpush1.msra.mxu0 0.0
          %481 = vmatprep.subr.mxu0 0.0
          %482 = vmatpush1.msra.mxu0 0.0
          %483 = vmatprep.subr.mxu0 0.0
          %484 = vmatpush1.msra.mxu0 0.0
          %485 = vmatprep.subr.mxu0 0.0
          %486 = vmatpush1.msra.mxu0 0.0
          %487 = vmatprep.subr.mxu0 0.0
          %488 = vmatpush1.msra.mxu0 0.0
          %489 = vmatprep.mubr.f32.mxu0 0.0
          %490 = vmatmul.mubr.f32.gmra.mrb[0].mxu0 %v374
          %v491 = vpop.f32.mrb[0].mxu0
          %v492 = vadd.f32 0.0, %v491
          %v493 = vpop.f32.mrb[0].mxu0
          %494 = vmatprep.mubr.f32.mxu0 0.0
          %495 = vmatmul.mubr.f32.gmra.mrb[0].mxu0 %v377
          %v496 = vpop.f32.mrb[0].mxu0
          %v497 = vadd.f32 0.0, %v496
          %v498 = vpop.f32.mrb[0].mxu0
          %499 = vmatprep.mubr.f32.mxu0 0.0
          %500 = vmatmul.mubr.f32.gmra.mrb[0].mxu0 %v380
          %v501 = vpop.f32.mrb[0].mxu0
          %v502 = vadd.f32 0.0, %v501
          %v503 = vpop.f32.mrb[0].mxu0
          %504 = vmatprep.mubr.f32.mxu0 0.0
          %505 = vmatmul.mubr.f32.gmra.mrb[0].mxu0 %v383
          %v506 = vpop.f32.mrb[0].mxu0
          %v507 = vadd.f32 0.0, %v506
          %v508 = vpop.f32.mrb[0].mxu0
          %509 = vmatprep.mubr.f32.mxu0 0.0
          %510 = vmatmul.mubr.f32.gmra.mrb[0].mxu0 %v386
          %v511 = vpop.f32.mrb[0].mxu0
          %v512 = vadd.f32 0.0, %v511
          %v513 = vpop.f32.mrb[0].mxu0
          %514 = vmatprep.mubr.f32.mxu0 0.0
          %515 = vmatmul.mubr.f32.gmra.mrb[0].mxu0 %v389
          %v516 = vpop.f32.mrb[0].mxu0
          %v517 = vadd.f32 0.0, %v516
          %v518 = vpop.f32.mrb[0].mxu0
          %519 = vmatprep.mubr.f32.mxu0 0.0
          %520 = vmatmul.mubr.f32.gmra.mrb[0].mxu0 %v392
          %v521 = vpop.f32.mrb[0].mxu0
          %v522 = vadd.f32 0.0, %v521
          %v523 = vpop.f32.mrb[0].mxu0
          %524 = vmatprep.mubr.f32.mxu0 0.0
          %525 = vmatmul.mubr.f32.gmra.mrb[0].mxu0 %v395
          %v526 = vpop.f32.mrb[0].mxu0
          %v527 = vadd.f32 0.0, %v526
          %v528 = vpop.f32.mrb[0].mxu0
          %529 = vmatprep.mubr.f32.mxu0 0.0
          %530 = vmatmul.mubr.f32.gmra.mrb[0].mxu0 %v398
          %v531 = vpop.f32.mrb[0].mxu0
          %v532 = vadd.f32 0.0, %v531
          %v533 = vpop.f32.mrb[0].mxu0
          %534 = vmatprep.mubr.f32.mxu0 0.0
          %535 = vmatmul.mubr.f32.gmra.mrb[0].mxu0 %v401
          %v536 = vpop.f32.mrb[0].mxu0
          %v537 = vadd.f32 0.0, %v536
          %v538 = vpop.f32.mrb[0].mxu0
          %539 = vmatprep.mubr.f32.mxu0 0.0
          %540 = vmatmul.mubr.f32.gmra.mrb[0].mxu0 %v404
          %v541 = vpop.f32.mrb[0].mxu0
          %v542 = vadd.f32 0.0, %v541
          %v543 = vpop.f32.mrb[0].mxu0
          %544 = vmatprep.mubr.f32.mxu0 0.0
          %545 = vmatmul.mubr.f32.gmra.mrb[0].mxu0 %v407
          %v546 = vpop.f32.mrb[0].mxu0
          %v547 = vadd.f32 0.0, %v546
          %v548 = vpop.f32.mrb[0].mxu0
          %549 = vmatprep.mubr.f32.mxu0 0.0
          %550 = vmatmul.mubr.f32.gmra.mrb[0].mxu0 %v410
          %v551 = vpop.f32.mrb[0].mxu0
          %v552 = vadd.f32 0.0, %v551
          %v553 = vpop.f32.mrb[0].mxu0
          %554 = vmatprep.mubr.f32.mxu0 0.0
          %555 = vmatmul.mubr.f32.gmra.mrb[0].mxu0 %v413
          %v556 = vpop.f32.mrb[0].mxu0
          %v557 = vadd.f32 0.0, %v556
          %v558 = vpop.f32.mrb[0].mxu0
          %559 = vmatprep.mubr.f32.mxu0 0.0
          %560 = vmatmul.mubr.f32.gmra.mrb[0].mxu0 %v416
          %v561 = vpop.f32.mrb[0].mxu0
          %v562 = vadd.f32 0.0, %v561
          %v563 = vpop.f32.mrb[0].mxu0
          %564 = vmatprep.mubr.f32.mxu0 0.0
          %565 = vmatmul.mubr.f32.gmra.mrb[0].mxu0 %v419
          %v566 = vpop.f32.mrb[0].mxu0
          %v567 = vadd.f32 0.0, %v566
          %v568 = vpop.f32.mrb[0].mxu0
          %569 = vdwg.mxu0
          %570 = vst [vmem:[#allocation2] sm:$0xff] %v492
          %571 = vst [vmem:[#allocation2 + $0x8] sm:$0xff] %v497
          %572 = vst [vmem:[#allocation2 + $0x10] sm:$0xff] %v502
          %573 = vst [vmem:[#allocation2 + $0x18] sm:$0xff] %v507
          %574 = vst [vmem:[#allocation2 + $0x20] sm:$0xff] %v512
          %575 = vst [vmem:[#allocation2 + $0x28] sm:$0xff] %v517
          %576 = vst [vmem:[#allocation2 + $0x30] sm:$0xff] %v522
          %577 = vst [vmem:[#allocation2 + $0x38] sm:$0xff] %v527
          %578 = vst [vmem:[#allocation2 + $0x40] sm:$0xff] %v532
          %579 = vst [vmem:[#allocation2 + $0x48] sm:$0xff] %v537
          %580 = vst [vmem:[#allocation2 + $0x50] sm:$0xff] %v542
          %581 = vst [vmem:[#allocation2 + $0x58] sm:$0xff] %v547
          %582 = vst [vmem:[#allocation2 + $0x60] sm:$0xff] %v552
          %583 = vst [vmem:[#allocation2 + $0x68] sm:$0xff] %v557
          %584 = vst [vmem:[#allocation2 + $0x70] sm:$0xff] %v562
          %585 = vst [vmem:[#allocation2 + $0x78] sm:$0xff] %v567
        $region44: #{tpu_custom_call.1} parent=35 // pred_fallthru
          _
        %v586 = vld [vmem:[%s321] sm:$0xff]
        %v587 = vld [vmem:[%s266] sm:$0xff]
        %v588 = vld [vmem:[#allocation2] sm:$0xff]
        %v589 = vld [vmem:[#allocation2 + $0x8] sm:$0xff]
        %v590 = vld [vmem:[#allocation2 + $0x10] sm:$0xff]
        %v591 = vld [vmem:[#allocation2 + $0x18] sm:$0xff]
        %v592 = vld [vmem:[#allocation2 + $0x20] sm:$0xff]
        %v593 = vld [vmem:[#allocation2 + $0x28] sm:$0xff]
        %v594 = vld [vmem:[#allocation2 + $0x30] sm:$0xff]
        %v595 = vld [vmem:[#allocation2 + $0x38] sm:$0xff]
        %v596 = vld [vmem:[#allocation2 + $0x40] sm:$0xff]
        %v597 = vld [vmem:[#allocation2 + $0x48] sm:$0xff]
        %v598 = vld [vmem:[#allocation2 + $0x50] sm:$0xff]
        %v599 = vld [vmem:[#allocation2 + $0x58] sm:$0xff]
        %v600 = vld [vmem:[#allocation2 + $0x60] sm:$0xff]
        %v601 = vld [vmem:[#allocation2 + $0x68] sm:$0xff]
        %v602 = vld [vmem:[#allocation2 + $0x70] sm:$0xff]
        %v603 = vld [vmem:[#allocation2 + $0x78] sm:$0xff]
        %604 = vxpose.xlu0.b32.start [1/16] %v586, 128
        %605 = vxpose.xlu0.b32.cont [2/16] 0.0, 128
        %606 = vxpose.xlu0.b32.cont [3/16] 0.0, 128
        %607 = vxpose.xlu0.b32.cont [4/16] 0.0, 128
        %608 = vxpose.xlu0.b32.cont [5/16] 0.0, 128
        %609 = vxpose.xlu0.b32.cont [6/16] 0.0, 128
        %610 = vxpose.xlu0.b32.cont [7/16] 0.0, 128
        %611 = vxpose.xlu0.b32.cont [8/16] 0.0, 128
        %612 = vxpose.xlu0.b32.cont [9/16] 0.0, 128
        %613 = vxpose.xlu0.b32.cont [10/16] 0.0, 128
        %614 = vxpose.xlu0.b32.cont [11/16] 0.0, 128
        %615 = vxpose.xlu0.b32.cont [12/16] 0.0, 128
        %616 = vxpose.xlu0.b32.cont [13/16] 0.0, 128
        %617 = vxpose.xlu0.b32.cont [14/16] 0.0, 128
        %618 = vxpose.xlu0.b32.cont [15/16] 0.0, 128
        %619 = vxpose.xlu0.b32.end [16/16] 0.0, 128
        %v620 = vpop.trf.xlu0
        %v621 = vpop.trf.xlu0
        %v622 = vpop.trf.xlu0
        %v623 = vpop.trf.xlu0
        %v624 = vpop.trf.xlu0
        %v625 = vpop.trf.xlu0
        %v626 = vpop.trf.xlu0
        %v627 = vpop.trf.xlu0
        %v628 = vpop.trf.xlu0
        %v629 = vpop.trf.xlu0
        %v630 = vpop.trf.xlu0
        %v631 = vpop.trf.xlu0
        %v632 = vpop.trf.xlu0
        %v633 = vpop.trf.xlu0
        %v634 = vpop.trf.xlu0
        %v635 = vpop.trf.xlu0
        %vm636 = vcmask 64512
        %v638 = vsel %vm636, %v620, 0
        %v641 = vsel %vm636, %v621, 0
        %v644 = vsel %vm636, %v622, 0
        %v647 = vsel %vm636, %v623, 0
        %v650 = vsel %vm636, %v624, 0
        %v653 = vsel %vm636, %v625, 0
        %v656 = vsel %vm636, %v626, 0
        %v659 = vsel %vm636, %v627, 0
        %v662 = vsel %vm636, %v628, 0
        %v665 = vsel %vm636, %v629, 0
        %v668 = vsel %vm636, %v630, 0
        %v671 = vsel %vm636, %v631, 0
        %v674 = vsel %vm636, %v632, 0
        %v677 = vsel %vm636, %v633, 0
        %v680 = vsel %vm636, %v634, 0
        %v683 = vsel %vm636, %v635, 0
        %685 = vmatprep.subr.mxu0 0.0
        %686 = vmatpush1.msra.mxu0 %v587
        %687 = vmatprep.subr.mxu0 0.0
        %688 = vmatpush1.msra.mxu0 0.0
        %689 = vmatprep.subr.mxu0 0.0
        %690 = vmatpush1.msra.mxu0 0.0
        %691 = vmatprep.subr.mxu0 0.0
        %692 = vmatpush1.msra.mxu0 0.0
        %693 = vmatprep.subr.mxu0 0.0
        %694 = vmatpush1.msra.mxu0 0.0
        %695 = vmatprep.subr.mxu0 0.0
        %696 = vmatpush1.msra.mxu0 0.0
        %697 = vmatprep.subr.mxu0 0.0
        %698 = vmatpush1.msra.mxu0 0.0
        %699 = vmatprep.subr.mxu0 0.0
        %700 = vmatpush1.msra.mxu0 0.0
        %701 = vmatprep.subr.mxu0 0.0
        %702 = vmatpush1.msra.mxu0 0.0
        %703 = vmatprep.subr.mxu0 0.0
        %704 = vmatpush1.msra.mxu0 0.0
        %705 = vmatprep.subr.mxu0 0.0
        %706 = vmatpush1.msra.mxu0 0.0
        %707 = vmatprep.subr.mxu0 0.0
        %708 = vmatpush1.msra.mxu0 0.0
        %709 = vmatprep.subr.mxu0 0.0
        %710 = vmatpush1.msra.mxu0 0.0
        %711 = vmatprep.subr.mxu0 0.0
        %712 = vmatpush1.msra.mxu0 0.0
        %713 = vmatprep.subr.mxu0 0.0
        %714 = vmatpush1.msra.mxu0 0.0
        %715 = vmatprep.subr.mxu0 0.0
        %716 = vmatpush1.msra.mxu0 0.0
        %717 = vmatprep.subr.mxu0 0.0
        %718 = vmatpush1.msra.mxu0 0.0
        %719 = vmatprep.subr.mxu0 0.0
        %720 = vmatpush1.msra.mxu0 0.0
        %721 = vmatprep.subr.mxu0 0.0
        %722 = vmatpush1.msra.mxu0 0.0
        %723 = vmatprep.subr.mxu0 0.0
        %724 = vmatpush1.msra.mxu0 0.0
        %725 = vmatprep.subr.mxu0 0.0
        %726 = vmatpush1.msra.mxu0 0.0
        %727 = vmatprep.subr.mxu0 0.0
        %728 = vmatpush1.msra.mxu0 0.0
        %729 = vmatprep.subr.mxu0 0.0
        %730 = vmatpush1.msra.mxu0 0.0
        %731 = vmatprep.subr.mxu0 0.0
        %732 = vmatpush1.msra.mxu0 0.0
        %733 = vmatprep.subr.mxu0 0.0
        %734 = vmatpush1.msra.mxu0 0.0
        %735 = vmatprep.subr.mxu0 0.0
        %736 = vmatpush1.msra.mxu0 0.0
        %737 = vmatprep.subr.mxu0 0.0
        %738 = vmatpush1.msra.mxu0 0.0
        %739 = vmatprep.subr.mxu0 0.0
        %740 = vmatpush1.msra.mxu0 0.0
        %741 = vmatprep.subr.mxu0 0.0
        %742 = vmatpush1.msra.mxu0 0.0
        %743 = vmatprep.subr.mxu0 0.0
        %744 = vmatpush1.msra.mxu0 0.0
        %745 = vmatprep.subr.mxu0 0.0
        %746 = vmatpush1.msra.mxu0 0.0
        %747 = vmatprep.subr.mxu0 0.0
        %748 = vmatpush1.msra.mxu0 0.0
        %749 = vmatprep.mubr.f32.mxu0 0.0
        %750 = vmatmul.mubr.f32.gmra.mrb[0].mxu0 %v638
        %v751 = vpop.f32.mrb[0].mxu0
        %v752 = vadd.f32 0.0, %v751
        %v753 = vpop.f32.mrb[0].mxu0
        %754 = vmatprep.mubr.f32.mxu0 0.0
        %755 = vmatmul.mubr.f32.gmra.mrb[0].mxu0 %v641
        %v756 = vpop.f32.mrb[0].mxu0
        %v757 = vadd.f32 0.0, %v756
        %v758 = vpop.f32.mrb[0].mxu0
        %759 = vmatprep.mubr.f32.mxu0 0.0
        %760 = vmatmul.mubr.f32.gmra.mrb[0].mxu0 %v644
        %v761 = vpop.f32.mrb[0].mxu0
        %v762 = vadd.f32 0.0, %v761
        %v763 = vpop.f32.mrb[0].mxu0
        %764 = vmatprep.mubr.f32.mxu0 0.0
        %765 = vmatmul.mubr.f32.gmra.mrb[0].mxu0 %v647
        %v766 = vpop.f32.mrb[0].mxu0
        %v767 = vadd.f32 0.0, %v766
        %v768 = vpop.f32.mrb[0].mxu0
        %769 = vmatprep.mubr.f32.mxu0 0.0
        %770 = vmatmul.mubr.f32.gmra.mrb[0].mxu0 %v650
        %v771 = vpop.f32.mrb[0].mxu0
        %v772 = vadd.f32 0.0, %v771
        %v773 = vpop.f32.mrb[0].mxu0
        %774 = vmatprep.mubr.f32.mxu0 0.0
        %775 = vmatmul.mubr.f32.gmra.mrb[0].mxu0 %v653
        %v776 = vpop.f32.mrb[0].mxu0
        %v777 = vadd.f32 0.0, %v776
        %v778 = vpop.f32.mrb[0].mxu0
        %779 = vmatprep.mubr.f32.mxu0 0.0
        %780 = vmatmul.mubr.f32.gmra.mrb[0].mxu0 %v656
        %v781 = vpop.f32.mrb[0].mxu0
        %v782 = vadd.f32 0.0, %v781
        %v783 = vpop.f32.mrb[0].mxu0
        %784 = vmatprep.mubr.f32.mxu0 0.0
        %785 = vmatmul.mubr.f32.gmra.mrb[0].mxu0 %v659
        %v786 = vpop.f32.mrb[0].mxu0
        %v787 = vadd.f32 0.0, %v786
        %v788 = vpop.f32.mrb[0].mxu0
        %789 = vmatprep.mubr.f32.mxu0 0.0
        %790 = vmatmul.mubr.f32.gmra.mrb[0].mxu0 %v662
        %v791 = vpop.f32.mrb[0].mxu0
        %v792 = vadd.f32 0.0, %v791
        %v793 = vpop.f32.mrb[0].mxu0
        %794 = vmatprep.mubr.f32.mxu0 0.0
        %795 = vmatmul.mubr.f32.gmra.mrb[0].mxu0 %v665
        %v796 = vpop.f32.mrb[0].mxu0
        %v797 = vadd.f32 0.0, %v796
        %v798 = vpop.f32.mrb[0].mxu0
        %799 = vmatprep.mubr.f32.mxu0 0.0
        %800 = vmatmul.mubr.f32.gmra.mrb[0].mxu0 %v668
        %v801 = vpop.f32.mrb[0].mxu0
        %v802 = vadd.f32 0.0, %v801
        %v803 = vpop.f32.mrb[0].mxu0
        %804 = vmatprep.mubr.f32.mxu0 0.0
        %805 = vmatmul.mubr.f32.gmra.mrb[0].mxu0 %v671
        %v806 = vpop.f32.mrb[0].mxu0
        %v807 = vadd.f32 0.0, %v806
        %v808 = vpop.f32.mrb[0].mxu0
        %809 = vmatprep.mubr.f32.mxu0 0.0
        %810 = vmatmul.mubr.f32.gmra.mrb[0].mxu0 %v674
        %v811 = vpop.f32.mrb[0].mxu0
        %v812 = vadd.f32 0.0, %v811
        %v813 = vpop.f32.mrb[0].mxu0
        %814 = vmatprep.mubr.f32.mxu0 0.0
        %815 = vmatmul.mubr.f32.gmra.mrb[0].mxu0 %v677
        %v816 = vpop.f32.mrb[0].mxu0
        %v817 = vadd.f32 0.0, %v816
        %v818 = vpop.f32.mrb[0].mxu0
        %819 = vmatprep.mubr.f32.mxu0 0.0
        %820 = vmatmul.mubr.f32.gmra.mrb[0].mxu0 %v680
        %v821 = vpop.f32.mrb[0].mxu0
        %v822 = vadd.f32 0.0, %v821
        %v823 = vpop.f32.mrb[0].mxu0
        %824 = vmatprep.mubr.f32.mxu0 0.0
        %825 = vmatmul.mubr.f32.gmra.mrb[0].mxu0 %v683
        %v826 = vpop.f32.mrb[0].mxu0
        %v827 = vadd.f32 0.0, %v826
        %v828 = vpop.f32.mrb[0].mxu0
        %829 = vdwg.mxu0
        %v830 = vadd.f32 %v588, %v752
        %v831 = vadd.f32 %v589, %v757
        %v832 = vadd.f32 %v590, %v762
        %v833 = vadd.f32 %v591, %v767
        %v834 = vadd.f32 %v592, %v772
        %v835 = vadd.f32 %v593, %v777
        %v836 = vadd.f32 %v594, %v782
        %v837 = vadd.f32 %v595, %v787
        %v838 = vadd.f32 %v596, %v792
        %v839 = vadd.f32 %v597, %v797
        %v840 = vadd.f32 %v598, %v802
        %v841 = vadd.f32 %v599, %v807
        %v842 = vadd.f32 %v600, %v812
        %v843 = vadd.f32 %v601, %v817
        %v844 = vadd.f32 %v602, %v822
        %v845 = vadd.f32 %v603, %v827
        %846 = vst [vmem:[#allocation2] sm:$0xff] %v830
        %847 = vst [vmem:[#allocation2 + $0x8] sm:$0xff] %v831
        %848 = vst [vmem:[#allocation2 + $0x10] sm:$0xff] %v832
        %849 = vst [vmem:[#allocation2 + $0x18] sm:$0xff] %v833
        %850 = vst [vmem:[#allocation2 + $0x20] sm:$0xff] %v834
        %851 = vst [vmem:[#allocation2 + $0x28] sm:$0xff] %v835
        %852 = vst [vmem:[#allocation2 + $0x30] sm:$0xff] %v836
        %853 = vst [vmem:[#allocation2 + $0x38] sm:$0xff] %v837
        %854 = vst [vmem:[#allocation2 + $0x40] sm:$0xff] %v838
        %855 = vst [vmem:[#allocation2 + $0x48] sm:$0xff] %v839
        %856 = vst [vmem:[#allocation2 + $0x50] sm:$0xff] %v840
        %857 = vst [vmem:[#allocation2 + $0x58] sm:$0xff] %v841
        %858 = vst [vmem:[#allocation2 + $0x60] sm:$0xff] %v842
        %859 = vst [vmem:[#allocation2 + $0x68] sm:$0xff] %v843
        %860 = vst [vmem:[#allocation2 + $0x70] sm:$0xff] %v844
        %861 = vst [vmem:[#allocation2 + $0x78] sm:$0xff] %v845
        // Predicated region
        $region45: #{tpu_custom_call.1} parent=35 // pred_check
          %p862 = pneg %p334
        $region46: #{tpu_custom_call.1} parent=35 // pred_check_branch
          %864 = sbr.rel (%p862) target = $region48
        $region47: #{tpu_custom_call.1} parent=35 // pred_region
          %v865 = vld [vmem:[#allocation2] sm:$0xff]
          %v866 = vld [vmem:[#allocation2 + $0x8] sm:$0xff]
          %v867 = vld [vmem:[#allocation2 + $0x10] sm:$0xff]
          %v868 = vld [vmem:[#allocation2 + $0x18] sm:$0xff]
          %v869 = vld [vmem:[#allocation2 + $0x20] sm:$0xff]
          %v870 = vld [vmem:[#allocation2 + $0x28] sm:$0xff]
          %v871 = vld [vmem:[#allocation2 + $0x30] sm:$0xff]
          %v872 = vld [vmem:[#allocation2 + $0x38] sm:$0xff]
          %v873 = vld [vmem:[#allocation2 + $0x40] sm:$0xff]
          %v874 = vld [vmem:[#allocation2 + $0x48] sm:$0xff]
          %v875 = vld [vmem:[#allocation2 + $0x50] sm:$0xff]
          %v876 = vld [vmem:[#allocation2 + $0x58] sm:$0xff]
          %v877 = vld [vmem:[#allocation2 + $0x60] sm:$0xff]
          %v878 = vld [vmem:[#allocation2 + $0x68] sm:$0xff]
          %v879 = vld [vmem:[#allocation2 + $0x70] sm:$0xff]
          %v880 = vld [vmem:[#allocation2 + $0x78] sm:$0xff]
          %881 = vst [vmem:[%s311] sm:$0xff] %v865
          %882 = vst [vmem:[%s311 + $0x8] sm:$0xff] %v866
          %883 = vst [vmem:[%s311 + $0x10] sm:$0xff] %v867
          %884 = vst [vmem:[%s311 + $0x18] sm:$0xff] %v868
          %885 = vst [vmem:[%s311 + $0x20] sm:$0xff] %v869
          %886 = vst [vmem:[%s311 + $0x28] sm:$0xff] %v870
          %887 = vst [vmem:[%s311 + $0x30] sm:$0xff] %v871
          %888 = vst [vmem:[%s311 + $0x38] sm:$0xff] %v872
          %889 = vst [vmem:[%s311 + $0x40] sm:$0xff] %v873
          %890 = vst [vmem:[%s311 + $0x48] sm:$0xff] %v874
          %891 = vst [vmem:[%s311 + $0x50] sm:$0xff] %v875
          %892 = vst [vmem:[%s311 + $0x58] sm:$0xff] %v876
          %893 = vst [vmem:[%s311 + $0x60] sm:$0xff] %v877
          %894 = vst [vmem:[%s311 + $0x68] sm:$0xff] %v878
          %895 = vst [vmem:[%s311 + $0x70] sm:$0xff] %v879
          %896 = vst [vmem:[%s311 + $0x78] sm:$0xff] %v880
        $region48: #{tpu_custom_call.1} parent=35 // pred_fallthru
          _
        %s897 = sand.u32 %s173, 1
        %s898 = scalar_lea.sflag [#allocation5], %s897
        %s899 = sand.u32 %s173, 1
        %s900 = smul.addr %s899, 128
        %s901 = scalar_lea.vmem [#allocation6], %s900
        // Predicated region
        $region49: #{tpu_custom_call.1} parent=35 // pred_check
          %p902 = pneg %p183
        $region50: #{tpu_custom_call.1} parent=35 // pred_check_branch
          %904 = sbr.rel (%p902) target = $region52
        $region51: #{tpu_custom_call.1} parent=35 // pred_region
          %s905 = smul.u32 16, %s28
          %s907 = ssub.s32 2048, 2048
          %908 = vsyncadd %s898, %s907
          %s909 = sadd.s32 %s29, %s905
          %s910 = smul.addr %s27, 16
          %s911 = sadd.s32 %s909, %s910
          %s912 = smul.addr %s911, 128
          %s913 = scalar_lea.hbm %s4, %s912
          %s914 = sshll.u32 %s901, 4
          %s915 = int_to_ptr.vmem [resolvable:$true] %s914
          %920 = dma.vmem_to_hbm [thread:$0]  %s915, 2048, %s913, %s898, 128, 128, 8
        $region52: #{tpu_custom_call.1} parent=35 // pred_fallthru
          _
      $region36: #{tpu_custom_call.1} parent=5 // pred_fallthru
        _
      %p921 = scmp.le.s32.totalorder 2, %s16
      // Predicated region
      $region53: #{tpu_custom_call.1} parent=5 // pred_check
        %p922 = pneg %p921
      $region54: #{tpu_custom_call.1} parent=5 // pred_check_branch
        %924 = sbr.rel (%p922) target = $region56
      $region55: #{tpu_custom_call.1} parent=5 // pred_region
        %s925 = ssub.s32 %s16, 2
        // Predicated region
        $region57: #{tpu_custom_call.1} parent=55 // pred_check
          %p926 = pneg %p189
        $region58: #{tpu_custom_call.1} parent=55 // pred_check_branch
          %928 = sbr.rel (%p926) target = $region60
        $region59: #{tpu_custom_call.1} parent=55 // pred_region
          %s929 = sand.u32 %s174, 1
          %s930 = scalar_lea.sflag [#allocation5], %s929
          %s931 = sand.u32 %s174, 1
          %s932 = smul.addr %s931, 128
          %s933 = scalar_lea.vmem [#allocation6], %s932
          %934 = dma.done %s930, 2048
        $region60: #{tpu_custom_call.1} parent=55 // pred_fallthru
          _
      $region56: #{tpu_custom_call.1} parent=5 // pred_fallthru
        _
    $region6: #{tpu_custom_call.1} parent=1 // loop_footer
      %s20 = sadd.s32 1, %s16
    $region7: #{tpu_custom_call.1} parent=1 // loop_footer_branch
      %15 = sbr.rel target = $region3
    $region8: #{tpu_custom_call.1} parent=1 // loop_exit
      _
    %935 = vsyncpa [#allocation4], 1
    %s936 = scalar_lea.sflag [#allocation4], 1
    %937 = vsyncpa %s936, 1
    %938 = vsyncpa [#allocation5], 1
    %s939 = scalar_lea.sflag [#allocation5], 1
    %940 = vsyncpa %s939, 1

</llo_original>
